<compile_context>
chip_gen: v7x
topology: tpu7x:2x2x1
jax: 0.10.0
libtpu: 0.0.40
codegen_flags: <defaults>
</compile_context>

<pallas_src>
import functools

import jax
import jax.numpy as jnp
from jax.experimental import pallas as pl
from jax.experimental.pallas import tpu as pltpu


# ---------------------------------------------------------------------------
# Kernel helpers (run inside the kernel body)
# ---------------------------------------------------------------------------

def _gap_matvec(x, inv_hw):
    """Average pool over the lane axis via an MXU batched matvec (f32 accum).

    x: (bB, C, hw) native dtype -> (bB, C, 1) float32, channels stay sublane-major.
    """
    bB, _, hw = x.shape
    ones = jnp.ones((bB, hw, 1), dtype=x.dtype)
    y = jnp.einsum("bch,bhk->bck", x, ones, preferred_element_type=jnp.float32)
    return y * inv_hw


def _channel_conv_sigmoid(w_ref, y, k_size):
    """k-wide 1-D conv over the (sublane) channel axis of y:(bB, C, 1) + sigmoid.

    Masked sublane-roll formulation: rides the XLU slot (free under DMA) and
    keeps C on sublanes so the later HW broadcast is a lane splat.
    """
    bB, C, _ = y.shape
    pad = (k_size - 1) // 2  # TODO(synk): even k_size would need PyTorch-style asymmetric padding.
    ch_idx = jax.lax.broadcasted_iota(jnp.int32, (bB, C, 1), 1)
    acc = jnp.zeros((bB, C, 1), dtype=jnp.float32)
    for j in range(k_size):
        s = j - pad  # out[c] += w[j] * y[c + s]   (zero outside [0, C))
        shifted = y if s == 0 else pltpu.roll(y, (-s) % C, axis=1)
        valid = (ch_idx + s >= 0) & (ch_idx + s < C)
        acc = acc + w_ref[j] * jnp.where(valid, shifted, 0.0)
    return jax.nn.sigmoid(acc)  # (bB, C, 1) float32


# ---------------------------------------------------------------------------
# Kernel bodies
# ---------------------------------------------------------------------------

def _eca_fused_kernel(w_ref, x_ref, o_ref, *, k_size, inv_hw):
    """Single-pass ECA over a (bB, C, HW) block: GAP + conv + sigmoid + gate."""
    x = x_ref[...]                                    # native dtype; no f32 copy
    y = _gap_matvec(x, inv_hw)                        # (bB, C, 1) f32 on the MXU
    gate = _channel_conv_sigmoid(w_ref, y, k_size)    # (bB, C, 1) f32
    o_ref[...] = x * gate.astype(o_ref.dtype)         # lane-splat broadcast


def _eca_gate_kernel(w_ref, x_ref, gate_ref, acc_ref, *, k_size, inv_hw):
    """Two-pass path, pass 1: spatially tiled GAP -> channel conv -> sigmoid."""
    h = pl.program_id(1)

    @pl.when(h == 0)
    def _():
        acc_ref[...] = jnp.zeros_like(acc_ref)

    acc_ref[...] += _gap_matvec(x_ref[...], 1.0)      # partial sums (1, C, 1)

    @pl.when(h == pl.num_programs(1) - 1)
    def _():
        y = acc_ref[...] * inv_hw
        gate_ref[...] = _channel_conv_sigmoid(w_ref, y, k_size)


def _eca_scale_kernel(gate_ref, x_ref, o_ref):
    """Two-pass path, pass 2: spatially tiled elementwise gate multiply."""
    o_ref[...] = x_ref[...] * gate_ref[...].astype(o_ref.dtype)


# ---------------------------------------------------------------------------
# Tiling / budgeting
# ---------------------------------------------------------------------------

_PIPELINE_FACTOR = 6       # 2x in + 2x out double-buffers + ~2x kernel temps
_VMEM_HEADROOM = 2 << 20


def _tpu_budget():
    """(target block bytes, vmem_limit cap) picked per TPU generation."""
    kind = ""
    try:
        kind = jax.devices()[0].device_kind.lower()
    except Exception:
        pass
    if "v7" in kind:                    # 64 MiB VMEM, ~3.2 TB/s HBM
        return 7 << 20, 44 << 20
    if "v6" in kind or "v5" in kind:    # 128 MiB VMEM
        return 14 << 20, 96 << 20
    return 7 << 20, 44 << 20            # conservative default


def _pick_batch_tile(B, per_batch_bytes, target_bytes):
    """Largest divisor of B whose block fits target_bytes, preferring >=2
    grid steps so the pipeline runs and both v7x TensorCores get work."""
    divisors = [d for d in range(1, B + 1) if B % d == 0]
    fitting = [d for d in divisors if d * per_batch_bytes <= target_bytes] or [1]
    bB = max(fitting)
    if B >= 2 and B // bB < 2:
        two_plus = [d for d in fitting if B // d >= 2]
        if two_plus:
            bB = max(two_plus)
    return bB


def _pick_spatial_tile(HW, per_hw_bytes, target_bytes):
    """Largest divisor of HW that is a multiple of 128 (lane-aligned blocks),
    fits target_bytes and yields >=2 spatial tiles; else (HW, 1)."""
    best = None
    for t in range(128, HW // 2 + 1, 128):
        if HW % t == 0 and t * per_hw_bytes <= target_bytes:
            best = t
    if best is None:
        return HW, 1
    return best, HW // best


# ---------------------------------------------------------------------------
# Wrappers
# ---------------------------------------------------------------------------

def _eca_two_pass(x_flat, conv_weight, k_size, inv_hw, tHW, n_hw, vmem_cap, itemsize):
    B, C, HW = x_flat.shape
    tile_bytes = C * tHW * itemsize
    vmem_limit = int(min(max(_PIPELINE_FACTOR * tile_bytes + _VMEM_HEADROOM,
                             16 << 20), vmem_cap))

    # Pass 1: spatially tiled GAP -> conv -> sigmoid gate (tiny f32 output).
    gate_kernel = functools.partial(_eca_gate_kernel, k_size=k_size, inv_hw=inv_hw)
    gate = pl.pallas_call(
        gate_kernel,
        out_shape=jax.ShapeDtypeStruct((B, C, 1), jnp.float32),
        grid_spec=pltpu.PrefetchScalarGridSpec(
            num_scalar_prefetch=1,               # conv weights resident in SMEM
            grid=(B, n_hw),
            in_specs=[pl.BlockSpec((1, C, tHW), lambda b, h, w: (b, 0, h))],
            out_specs=pl.BlockSpec((1, C, 1), lambda b, h, w: (b, 0, 0)),
            scratch_shapes=[pltpu.VMEM((1, C, 1), jnp.float32)],
        ),
        compiler_params=pltpu.CompilerParams(
            dimension_semantics=("parallel", "arbitrary"),
            vmem_limit_bytes=vmem_limit,
        ),
        cost_estimate=pl.CostEstimate(
            flops=2 * B * C * HW + 2 * k_size * B * C,
            transcendentals=B * C,
            bytes_accessed=B * C * HW * itemsize + B * C * 4 + k_size * 4,
        ),
    )(conv_weight, x_flat)

    # Pass 2: spatially tiled elementwise gate multiply.
    out_flat = pl.pallas_call(
        _eca_scale_kernel,
        out_shape=jax.ShapeDtypeStruct((B, C, HW), x_flat.dtype),
        grid_spec=pltpu.PrefetchScalarGridSpec(
            num_scalar_prefetch=0,
            grid=(B, n_hw),
            in_specs=[
                pl.BlockSpec((1, C, 1), lambda b, h: (b, 0, 0)),
                pl.BlockSpec((1, C, tHW), lambda b, h: (b, 0, h)),
            ],
            out_specs=pl.BlockSpec((1, C, tHW), lambda b, h: (b, 0, h)),
        ),
        compiler_params=pltpu.CompilerParams(
            dimension_semantics=("parallel", "parallel"),
            vmem_limit_bytes=vmem_limit,
        ),
        cost_estimate=pl.CostEstimate(
            flops=B * C * HW,
            transcendentals=0,
            bytes_accessed=2 * B * C * HW * itemsize + B * C * 4,
        ),
    )(gate, x_flat)
    return out_flat


def eca_forward(x, conv_weight, k_size=3, two_pass=None):
    """ECA forward. x: (B, C, H, W), conv_weight: (k_size,) float32."""
    B, C, H, W = x.shape
    HW = H * W
    x_flat = x.reshape(B, C, HW)   # free for contiguous NCHW; lane-dense layout
    itemsize = jnp.dtype(x.dtype).itemsize
    inv_hw = 1.0 / HW

    target_bytes, vmem_cap = _tpu_budget()
    per_batch_bytes = C * HW * itemsize
    bB = _pick_batch_tile(B, per_batch_bytes, target_bytes)
    block_bytes = bB * per_batch_bytes
    single_vmem = _PIPELINE_FACTOR * block_bytes + _VMEM_HEADROOM
    single_steps = B // bB
    total_bytes = B * per_batch_bytes

    tHW, n_hw = _pick_spatial_tile(HW, C * itemsize, target_bytes)

    # Two-pass path when a single-batch block blows the VMEM budget, or the
    # batch-only grid gives <2 steps (no pipelining, idle v7x TensorCore)
    # while the activation is big enough that two launches are worth it.
    auto_two_pass = n_hw >= 2 and (
        single_vmem > vmem_cap
        or (single_steps < 2 and total_bytes >= (2 << 20))
    )
    use_two_pass = auto_two_pass if two_pass is None else (bool(two_pass) and n_hw >= 2)

    if use_two_pass:
        out_flat = _eca_two_pass(x_flat, conv_weight, k_size, inv_hw,
                                 tHW, n_hw, vmem_cap, itemsize)
        return out_flat.reshape(B, C, H, W)

    # ----- single fused pass over (bB, C, HW) blocks -----
    # TODO(synk): if a single-batch block still exceeds the VMEM cap and HW has
    # no 128-multiple divisor, pad HW in a fused producer instead of clamping.
    kernel = functools.partial(_eca_fused_kernel, k_size=k_size, inv_hw=inv_hw)
    vmem_limit = int(min(max(single_vmem, 16 << 20), vmem_cap))
    cost = pl.CostEstimate(
        flops=2 * B * C * HW + 2 * k_size * B * C,
        transcendentals=B * C,
        bytes_accessed=2 * B * C * HW * itemsize + k_size * 4,
    )
    out_flat = pl.pallas_call(
        kernel,
        out_shape=jax.ShapeDtypeStruct((B, C, HW), x.dtype),
        grid_spec=pltpu.PrefetchScalarGridSpec(
            num_scalar_prefetch=1,               # conv weights resident in SMEM
            grid=(B // bB,),
            in_specs=[pl.BlockSpec((bB, C, HW), lambda b, w: (b, 0, 0))],
            out_specs=pl.BlockSpec((bB, C, HW), lambda b, w: (b, 0, 0)),
        ),
        compiler_params=pltpu.CompilerParams(
            dimension_semantics=("parallel",),
            vmem_limit_bytes=vmem_limit,
        ),
        cost_estimate=cost,
        # TODO(synk): add input_output_aliases={1: 0} once callers donate x
        # (without donation XLA inserts a defensive copy, costing bandwidth).
    )(conv_weight, x_flat)
    return out_flat.reshape(B, C, H, W)


def eca_reference(x, conv_weight, k_size=3):
    """Pure-JAX reference matching PyTorch ECA semantics."""
    B, C, H, W = x.shape
    y = jnp.mean(x.astype(jnp.float32), axis=(2, 3))  # (B, C)
    pad = (k_size - 1) // 2
    y_p = jnp.pad(y, ((0, 0), (pad, pad)))
    out = jnp.zeros_like(y)
    for j in range(k_size):
        out = out + conv_weight[j] * y_p[:, j:j + C]
    gate = jax.nn.sigmoid(out)[:, :, None, None]
    return (x.astype(jnp.float32) * gate).astype(x.dtype)


if __name__ == "__main__":
    key = jax.random.PRNGKey(0)
    kx, kw, kx2, kx3 = jax.random.split(key, 4)

    k_size = 3
    bound = 1.0 / jnp.sqrt(float(k_size))
    # Conv1d(1, 1, k_size, bias=False) weight (1, 1, k) -> flat (k,), synthetic init.
    conv_weight = jax.random.uniform(
        kw, (k_size,), minval=-bound, maxval=bound, dtype=jnp.float32
    )

    # 1) fused single-pass path, float32
    B, C, H, W = 2, 4, 16, 16
    x = jax.random.normal(kx, (B, C, H, W), dtype=jnp.float32)
    out = jax.block_until_ready(eca_forward(x, conv_weight, k_size=k_size))
    ref = eca_reference(x, conv_weight, k_size=k_size)
    assert out.shape == (B, C, H, W)
    assert jnp.allclose(out, ref, atol=1e-5, rtol=1e-5)

    # 2) two-pass (spatially tiled) path, float32
    x2 = jax.random.normal(kx2, (1, 8, 16, 32), dtype=jnp.float32)
    out2 = jax.block_until_ready(
        eca_forward(x2, conv_weight, k_size=k_size, two_pass=True))
    ref2 = eca_reference(x2, conv_weight, k_size=k_size)
    assert jnp.allclose(out2, ref2, atol=1e-5, rtol=1e-5)

    # 3) fused path, bfloat16 (gate applied in native dtype -> looser tolerance)
    x3 = jax.random.normal(kx3, (2, 8, 8, 16), dtype=jnp.bfloat16)
    out3 = jax.block_until_ready(eca_forward(x3, conv_weight, k_size=k_size))
    ref3 = eca_reference(x3, conv_weight, k_size=k_size)
    assert jnp.allclose(out3.astype(jnp.float32), ref3.astype(jnp.float32),
                        atol=5e-2, rtol=5e-2)

    print("KERNEL_OK")
</pallas_src>

<mosaic_0001>
module attributes {stable_mosaic.version = 11 : i64} {
  func.func @_eca_fused_kernel(%arg0: i32, %arg1: memref<3xf32, #tpu.memory_space<smem>>, %arg2: memref<1x4x256xf32, #tpu.memory_space<vmem>>, %arg3: memref<1x4x256xf32, #tpu.memory_space<vmem>>) attributes {dimension_semantics = [#tpu.dimension_semantics<parallel>], iteration_bounds = array<i64: 2>, scalar_prefetch = 1 : i64, scratch_operands = 0 : i64, tpu.core_type = #tpu.core_type<tc>, window_params = [{transform_indices = @transform_0, window_bounds = array<i64: 1, 4, 256>}, {transform_indices = @transform_1, window_bounds = array<i64: 1, 4, 256>}]} {
    %c0 = arith.constant 0 : index
    %c0_0 = arith.constant 0 : index
    %c0_1 = arith.constant 0 : index
    %0 = vector.load %arg2[%c0, %c0_0, %c0_1] : memref<1x4x256xf32, #tpu.memory_space<vmem>>, vector<1x4x256xf32>
    %cst = arith.constant 1.000000e+00 : f32
    %1 = vector.broadcast %cst : f32 to vector<1x256x1xf32>
    "tpu.trace_start"() <{level = 10 : i32, message = "bch,bhk->bck"}> : () -> ()
    %cst_2 = arith.constant dense<0.000000e+00> : vector<1x4x1xf32>
    %2 = tpu.matmul %0, %1, %cst_2 {dimension_numbers = #tpu.dot_dimension_numbers<[2], [1], [1], [2], [0, 0, 0, 1, 1, 2], [0], [0]>} : vector<1x4x256xf32>, vector<1x256x1xf32>, vector<1x4x1xf32> -> vector<1x4x1xf32>
    "tpu.trace_stop"() : () -> ()
    %cst_3 = arith.constant 3.906250e-03 : f32
    %3 = vector.broadcast %cst_3 : f32 to vector<1x4x1xf32>
    %4 = arith.mulf %2, %3 : vector<1x4x1xf32>
    %5 = tpu.iota {dimensions = array<i32: 1>} : vector<1x4x1xi32>
    %cst_4 = arith.constant 0.000000e+00 : f32
    %6 = vector.broadcast %cst_4 : f32 to vector<1x4x1xf32>
    %c1_i32 = arith.constant 1 : i32
    %7 = tpu.dynamic_rotate %4 by %c1_i32 dim 1 : vector<1x4x1xf32>, i32 -> vector<1x4x1xf32>
    %c-1_i32 = arith.constant -1 : i32
    %8 = vector.broadcast %c-1_i32 : i32 to vector<1x4x1xi32>
    %9 = arith.addi %5, %8 : vector<1x4x1xi32>
    %c0_i32 = arith.constant 0 : i32
    %10 = vector.broadcast %c0_i32 : i32 to vector<1x4x1xi32>
    %11 = arith.cmpi sge, %9, %10 : vector<1x4x1xi32>
    %c-1_i32_5 = arith.constant -1 : i32
    %12 = vector.broadcast %c-1_i32_5 : i32 to vector<1x4x1xi32>
    %13 = arith.addi %5, %12 : vector<1x4x1xi32>
    %c4_i32 = arith.constant 4 : i32
    %14 = vector.broadcast %c4_i32 : i32 to vector<1x4x1xi32>
    %15 = arith.cmpi slt, %13, %14 : vector<1x4x1xi32>
    %16 = arith.andi %11, %15 : vector<1x4x1xi1>
    %c0_6 = arith.constant 0 : index
    %17 = memref.load %arg1[%c0_6] : memref<3xf32, #tpu.memory_space<smem>>
    %cst_7 = arith.constant 0.000000e+00 : f32
    %18 = vector.broadcast %cst_7 : f32 to vector<1x4x1xf32>
    %19 = arith.select %16, %7, %18 : vector<1x4x1xi1>, vector<1x4x1xf32>
    %20 = vector.broadcast %17 : f32 to vector<1x4x1xf32>
    %21 = arith.mulf %20, %19 : vector<1x4x1xf32>
    %22 = arith.addf %6, %21 : vector<1x4x1xf32>
    %c0_i32_8 = arith.constant 0 : i32
    %23 = vector.broadcast %c0_i32_8 : i32 to vector<1x4x1xi32>
    %24 = arith.addi %5, %23 : vector<1x4x1xi32>
    %c0_i32_9 = arith.constant 0 : i32
    %25 = vector.broadcast %c0_i32_9 : i32 to vector<1x4x1xi32>
    %26 = arith.cmpi sge, %24, %25 : vector<1x4x1xi32>
    %c0_i32_10 = arith.constant 0 : i32
    %27 = vector.broadcast %c0_i32_10 : i32 to vector<1x4x1xi32>
    %28 = arith.addi %5, %27 : vector<1x4x1xi32>
    %c4_i32_11 = arith.constant 4 : i32
    %29 = vector.broadcast %c4_i32_11 : i32 to vector<1x4x1xi32>
    %30 = arith.cmpi slt, %28, %29 : vector<1x4x1xi32>
    %31 = arith.andi %26, %30 : vector<1x4x1xi1>
    %c1 = arith.constant 1 : index
    %32 = memref.load %arg1[%c1] : memref<3xf32, #tpu.memory_space<smem>>
    %cst_12 = arith.constant 0.000000e+00 : f32
    %33 = vector.broadcast %cst_12 : f32 to vector<1x4x1xf32>
    %34 = arith.select %31, %4, %33 : vector<1x4x1xi1>, vector<1x4x1xf32>
    %35 = vector.broadcast %32 : f32 to vector<1x4x1xf32>
    %36 = arith.mulf %35, %34 : vector<1x4x1xf32>
    %37 = arith.addf %22, %36 : vector<1x4x1xf32>
    %c3_i32 = arith.constant 3 : i32
    %38 = tpu.dynamic_rotate %4 by %c3_i32 dim 1 : vector<1x4x1xf32>, i32 -> vector<1x4x1xf32>
    %c1_i32_13 = arith.constant 1 : i32
    %39 = vector.broadcast %c1_i32_13 : i32 to vector<1x4x1xi32>
    %40 = arith.addi %5, %39 : vector<1x4x1xi32>
    %c0_i32_14 = arith.constant 0 : i32
    %41 = vector.broadcast %c0_i32_14 : i32 to vector<1x4x1xi32>
    %42 = arith.cmpi sge, %40, %41 : vector<1x4x1xi32>
    %c1_i32_15 = arith.constant 1 : i32
    %43 = vector.broadcast %c1_i32_15 : i32 to vector<1x4x1xi32>
    %44 = arith.addi %5, %43 : vector<1x4x1xi32>
    %c4_i32_16 = arith.constant 4 : i32
    %45 = vector.broadcast %c4_i32_16 : i32 to vector<1x4x1xi32>
    %46 = arith.cmpi slt, %44, %45 : vector<1x4x1xi32>
    %47 = arith.andi %42, %46 : vector<1x4x1xi1>
    %c2 = arith.constant 2 : index
    %48 = memref.load %arg1[%c2] : memref<3xf32, #tpu.memory_space<smem>>
    %cst_17 = arith.constant 0.000000e+00 : f32
    %49 = vector.broadcast %cst_17 : f32 to vector<1x4x1xf32>
    %50 = arith.select %47, %38, %49 : vector<1x4x1xi1>, vector<1x4x1xf32>
    %51 = vector.broadcast %48 : f32 to vector<1x4x1xf32>
    %52 = arith.mulf %51, %50 : vector<1x4x1xf32>
    %53 = arith.addf %37, %52 : vector<1x4x1xf32>
    %54 = arith.negf %53 : vector<1x4x1xf32>
    %55 = math.exp %54 : vector<1x4x1xf32>
    %cst_18 = arith.constant 1.000000e+00 : f32
    %56 = vector.broadcast %cst_18 : f32 to vector<1x4x1xf32>
    %57 = arith.addf %56, %55 : vector<1x4x1xf32>
    %58 = arith.divf %56, %57 : vector<1x4x1xf32>
    %59 = vector.broadcast %58 : vector<1x4x1xf32> to vector<1x4x256xf32>
    %60 = arith.mulf %0, %59 : vector<1x4x256xf32>
    %c0_19 = arith.constant 0 : index
    %c0_20 = arith.constant 0 : index
    %c0_21 = arith.constant 0 : index
    %61 = vector.load %arg3[%c0_19, %c0_20, %c0_21] : memref<1x4x256xf32, #tpu.memory_space<vmem>>, vector<1x4x256xf32>
    tpu.vector_store %arg3[%c0_19, %c0_20, %c0_21], %60 {strides = array<i32>} : memref<1x4x256xf32, #tpu.memory_space<vmem>>, vector<1x4x256xf32>,
    return
  }
  func.func @transform_0(%arg0: i32, %arg1: memref<3xf32, #tpu.memory_space<smem>>) -> (i32, i32, i32) {
    %c0_i32 = arith.constant 0 : i32
    %c0_i32_0 = arith.constant 0 : i32
    %c0_i32_1 = arith.constant 0 : i32
    return %arg0, %c0_i32, %c0_i32_0 : i32, i32, i32
  }
  func.func @transform_1(%arg0: i32, %arg1: memref<3xf32, #tpu.memory_space<smem>>) -> (i32, i32, i32) {
    %c0_i32 = arith.constant 0 : i32
    %c0_i32_0 = arith.constant 0 : i32
    %c0_i32_1 = arith.constant 0 : i32
    return %arg0, %c0_i32, %c0_i32_0 : i32, i32, i32
  }
}

</mosaic_0001>

<llo_original>
// kernel: tpu_custom_call.1
$region0: #{tpu_custom_call.1}
  #allocation0 [shape = 'u32[]', space=smem, size = 0x4, offset = 0x4, fixed_abs, tag = 'smem constant byte address 0x4 - core index']
  #allocation1 [shape = 'u32[144,128]{1,0:T(1,128)}', space=vmem, size = 0x12000, scoped, tag = 'internal scratch']
  #allocation2 [shape = 's32[1]{0}', space=sflag, size = 0x4, scoped, tag = 'scoped memory for tpu_custom_call.1']
  #allocation3 [shape = 'u8[512]{0}', space=smem, size = 0x200, scoped, tag = 'prefetched SMEM operand 0']
  %s0 = inlined_call_operand.hbm [shape: f32[3], index: 0, kind: input, shape index: {}]
  %s1 = inlined_call_operand.hbm [shape: f32[2,4,256], index: 1, kind: input, shape index: {}]
  %s2 = inlined_call_operand.hbm [shape: f32[2,4,256], index: 2, kind: output, shape index: {}]
  %s3 = sld [smem:[#allocation0]]
  $region41: #{tpu_custom_call.1} parent=0
    _
  %s5 = ssub.s32 1, %s3
  %s6 = scalar_select 0, %s5, %s3
  %8 = dma.hbm_to_smem %s0, 16, [#allocation3], [#allocation2]
  %9 = dma.done [#allocation2], 16
  %10 = sfence
  $region1: #{tpu_custom_call.1} parent=0
    #allocation4 [shape = 'u8[8192]{0}', space=vmem, size = 0x2000, scoped, tag = 'input window, operand 1']
    #allocation5 [shape = 's32[2]{0}', space=sflag, size = 0x8, scoped, tag = 'scoped memory for tpu_custom_call.1']
    #allocation6 [shape = 's32[2]{0}', space=sflag, size = 0x8, scoped, tag = 'scoped memory for tpu_custom_call.1']
    #allocation7 [shape = 'u8[8192]{0}', space=vmem, size = 0x2000, scoped, tag = 'output window, operand 0']
    %11 = vsyncpa [#allocation5], 0
    %s12 = scalar_lea.sflag [#allocation5], 1
    %13 = vsyncpa %s12, 0
    %14 = vsyncpa [#allocation6], 0
    %s15 = scalar_lea.sflag [#allocation6], 1
    %16 = vsyncpa %s15, 0
    loop: start=0, step=1, limit=4
    $region2: #{tpu_custom_call.1} parent=1 // loop_pre_header
      _
    $region3: #{tpu_custom_call.1} parent=1 // loop_header
      %s18 = sphi 0, %s22
      %p19 = scmp.ge.s32.totalorder %s18, 4
      %s28 = sphi 0, %s30
      %s31 = sphi 0, %s28
      %s32 = sphi 0, %s31
      %s48 = sphi 0, %s32
      %s54 = sphi 0, %s56
      %s57 = sphi 0, %s54
      %s58 = sphi 0, %s57
      %s74 = sphi 0, %s58
    $region4: #{tpu_custom_call.1} parent=1 // loop_header_branch
      %21 = sbr.rel (%p19) target = $region8
    $region5: #{tpu_custom_call.1} parent=1 // loop_body
      %s23 = ssub.s32 %s18, 1
      %s24 = ssub.s32 %s18, 2
      %s25 = sadd.s32 %s18, 1
      %s26 = ssub.s32 %s18, %s25
      %p27 = scmp.eq.s32.totalorder %s26, 0
      %s29 = sadd.s32 %s28, 1
      %s30 = scalar_select %p27, %s28, %s29
      %p33 = pneg %p27
      %p34 = scmp.eq.s32.totalorder %s18, 1
      %p35 = por %p33, %p34
      %p36 = scmp.ne.s32.totalorder %s28, %s31
      %p37 = scmp.eq.s32.totalorder %s18, 0
      %p38 = por %p36, %p37
      %p39 = scmp.ne.s32.totalorder %s28, %s31
      %p40 = scmp.eq.s32.totalorder %s23, 1
      %p41 = por %p39, %p40
      %p42 = scmp.ne.s32.totalorder %s31, %s32
      %p43 = scmp.eq.s32.totalorder %s23, 0
      %p44 = por %p42, %p43
      %p45 = scmp.ne.s32.totalorder %s31, %s32
      %p46 = scmp.eq.s32.totalorder %s24, 1
      %p47 = por %p45, %p46
      %p49 = scmp.ne.s32.totalorder %s32, %s48
      %p50 = scmp.eq.s32.totalorder %s24, 0
      %p51 = por %p49, %p50
      %s52 = ssub.s32 %s18, %s25
      %p53 = scmp.eq.s32.totalorder %s52, 0
      %s55 = sadd.s32 %s54, 1
      %s56 = scalar_select %p53, %s54, %s55
      %p59 = pneg %p53
      %p60 = scmp.eq.s32.totalorder %s18, 1
      %p61 = por %p59, %p60
      %p62 = scmp.ne.s32.totalorder %s54, %s57
      %p63 = scmp.eq.s32.totalorder %s18, 0
      %p64 = por %p62, %p63
      %p65 = scmp.ne.s32.totalorder %s54, %s57
      %p66 = scmp.eq.s32.totalorder %s23, 1
      %p67 = por %p65, %p66
      %p68 = scmp.ne.s32.totalorder %s57, %s58
      %p69 = scmp.eq.s32.totalorder %s23, 0
      %p70 = por %p68, %p69
      %p71 = scmp.ne.s32.totalorder %s57, %s58
      %p72 = scmp.eq.s32.totalorder %s24, 1
      %p73 = por %p71, %p72
      %p75 = scmp.ne.s32.totalorder %s58, %s74
      %p76 = scmp.eq.s32.totalorder %s24, 0
      %p77 = por %p75, %p76
      %p78 = scmp.le.s32.totalorder 1, %s18
      %p79 = scmp.lt.s32.totalorder %s18, 3
      %p80 = pnand %p78, %p79
      %p81 = pneg %p80
      // Predicated region
      $region9: #{tpu_custom_call.1} parent=5 // pred_check
        _
      $region10: #{tpu_custom_call.1} parent=5 // pred_check_branch
        %83 = sbr.rel (%p80) target = $region12
      $region11: #{tpu_custom_call.1} parent=5 // pred_region
        %s84 = ssub.s32 %s18, 1
      $region12: #{tpu_custom_call.1} parent=5 // pred_fallthru
        _
      %p85 = scmp.lt.s32.totalorder %s18, 2
      // Predicated region
      $region13: #{tpu_custom_call.1} parent=5 // pred_check
        %p86 = pneg %p85
      $region14: #{tpu_custom_call.1} parent=5 // pred_check_branch
        %88 = sbr.rel (%p86) target = $region16
      $region15: #{tpu_custom_call.1} parent=5 // pred_region
        // Predicated region
        $region17: #{tpu_custom_call.1} parent=15 // pred_check
          %p89 = pneg %p38
        $region18: #{tpu_custom_call.1} parent=15 // pred_check_branch
          %91 = sbr.rel (%p89) target = $region20
        $region19: #{tpu_custom_call.1} parent=15 // pred_region
          %s92 = sand.u32 %s28, 1
          %s93 = scalar_lea.sflag [#allocation5], %s92
          %s94 = sand.u32 %s28, 1
          %s95 = smul.addr %s94, 8
          %s96 = scalar_lea.vmem [#allocation4], %s95
          %s98 = ssub.s32 128, 128
          %99 = vsyncadd %s93, %s98
          %s100 = smul.addr %s18, 2
          %s101 = smul.addr %s100, 64
          %s102 = scalar_lea.hbm %s1, %s101
          %s104 = sshll.u32 %s96, 4
          %s105 = int_to_ptr.vmem [resolvable:$true] %s104
          %107 = dma.hbm_to_vmem [thread:$0]  %s102, 128, %s105, %s93
        $region20: #{tpu_custom_call.1} parent=15 // pred_fallthru
          _
      $region16: #{tpu_custom_call.1} parent=5 // pred_fallthru
        _
      %p108 = scmp.le.s32.totalorder 1, %s18
      %p109 = scmp.lt.s32.totalorder %s18, 3
      %p110 = pnand %p108, %p109
      %p111 = pneg %p110
      // Predicated region
      $region21: #{tpu_custom_call.1} parent=5 // pred_check
        _
      $region22: #{tpu_custom_call.1} parent=5 // pred_check_branch
        %113 = sbr.rel (%p110) target = $region24
      $region23: #{tpu_custom_call.1} parent=5 // pred_region
        %s114 = ssub.s32 %s18, 1
        %s115 = sand.u32 %s31, 1
        %s116 = scalar_lea.sflag [#allocation5], %s115
        %s117 = sand.u32 %s31, 1
        %s118 = smul.addr %s117, 8
        %s119 = scalar_lea.vmem [#allocation4], %s118
        // Predicated region
        $region25: #{tpu_custom_call.1} parent=23 // pred_check
          %p120 = pneg %p44
        $region26: #{tpu_custom_call.1} parent=23 // pred_check_branch
          %122 = sbr.rel (%p120) target = $region28
        $region27: #{tpu_custom_call.1} parent=23 // pred_region
          %123 = dma.done %s116, 128
        $region28: #{tpu_custom_call.1} parent=23 // pred_fallthru
          _
        %s124 = sand.u32 %s31, 1
        %s125 = scalar_lea.sflag [#allocation5], %s124
        %s126 = sand.u32 %s31, 1
        %s127 = smul.addr %s126, 8
        %s128 = scalar_lea.vmem [#allocation4], %s127
        %p129 = pneg %p44
        %p130 = pneg %p41
        %p131 = pneg %p70
        %p132 = pneg %p67
        %s133 = sand.u32 %s57, 1
        %s134 = scalar_lea.sflag [#allocation6], %s133
        %s135 = sand.u32 %s57, 1
        %s136 = smul.addr %s135, 8
        %s137 = scalar_lea.vmem [#allocation7], %s136
        %v138 = vld [vmem:[%s119] sm:$0xff]
        %v140 = vcombine.high %v138, %v138
        %142 = vmatprep.subr.mxu0 0.0
        %143 = vmatpush1.msra.mxu0 1.0
        %144 = vmatprep.subr.mxu0 0.0
        %145 = vmatpush1.msra.mxu0 1.0
        %146 = vmatprep.subr.mxu0 0.0
        %147 = vmatpush1.msra.mxu0 1.0
        %148 = vmatprep.subr.mxu0 0.0
        %149 = vmatpush1.msra.mxu0 1.0
        %150 = vmatprep.subr.mxu0 0.0
        %151 = vmatpush1.msra.mxu0 1.0
        %152 = vmatprep.subr.mxu0 0.0
        %153 = vmatpush1.msra.mxu0 1.0
        %154 = vmatprep.subr.mxu0 0.0
        %155 = vmatpush1.msra.mxu0 1.0
        %156 = vmatprep.subr.mxu0 0.0
        %157 = vmatpush1.msra.mxu0 1.0
        %158 = vmatprep.subr.mxu0 0.0
        %159 = vmatpush1.msra.mxu0 1.0
        %160 = vmatprep.subr.mxu0 0.0
        %161 = vmatpush1.msra.mxu0 1.0
        %162 = vmatprep.subr.mxu0 0.0
        %163 = vmatpush1.msra.mxu0 1.0
        %164 = vmatprep.subr.mxu0 0.0
        %165 = vmatpush1.msra.mxu0 1.0
        %166 = vmatprep.subr.mxu0 0.0
        %167 = vmatpush1.msra.mxu0 1.0
        %168 = vmatprep.subr.mxu0 0.0
        %169 = vmatpush1.msra.mxu0 1.0
        %170 = vmatprep.subr.mxu0 0.0
        %171 = vmatpush1.msra.mxu0 1.0
        %172 = vmatprep.subr.mxu0 0.0
        %173 = vmatpush1.msra.mxu0 1.0
        %174 = vmatprep.subr.mxu0 0.0
        %175 = vmatpush1.msra.mxu0 1.0
        %176 = vmatprep.subr.mxu0 0.0
        %177 = vmatpush1.msra.mxu0 1.0
        %178 = vmatprep.subr.mxu0 0.0
        %179 = vmatpush1.msra.mxu0 1.0
        %180 = vmatprep.subr.mxu0 0.0
        %181 = vmatpush1.msra.mxu0 1.0
        %182 = vmatprep.subr.mxu0 0.0
        %183 = vmatpush1.msra.mxu0 1.0
        %184 = vmatprep.subr.mxu0 0.0
        %185 = vmatpush1.msra.mxu0 1.0
        %186 = vmatprep.subr.mxu0 0.0
        %187 = vmatpush1.msra.mxu0 1.0
        %188 = vmatprep.subr.mxu0 0.0
        %189 = vmatpush1.msra.mxu0 1.0
        %190 = vmatprep.subr.mxu0 0.0
        %191 = vmatpush1.msra.mxu0 1.0
        %192 = vmatprep.subr.mxu0 0.0
        %193 = vmatpush1.msra.mxu0 1.0
        %194 = vmatprep.subr.mxu0 0.0
        %195 = vmatpush1.msra.mxu0 1.0
        %196 = vmatprep.subr.mxu0 0.0
        %197 = vmatpush1.msra.mxu0 1.0
        %198 = vmatprep.subr.mxu0 0.0
        %199 = vmatpush1.msra.mxu0 1.0
        %200 = vmatprep.subr.mxu0 0.0
        %201 = vmatpush1.msra.mxu0 1.0
        %202 = vmatprep.subr.mxu0 0.0
        %203 = vmatpush1.msra.mxu0 1.0
        %204 = vmatprep.subr.mxu0 0.0
        %205 = vmatpush1.msra.mxu0 1.0
        %206 = vmatprep.mubr.f32.mxu0 %v140
        %207 = vmatmul.mubr.f32.gmra.mrb[0].mxu0 %v138
        %v208 = vpop.f32.mrb[0].mxu0
        %v209 = vadd.f32 0.0, %v208
        %v210 = vpop.f32.mrb[0].mxu0
        %211 = vdwg.mxu0
        %v212 = vmul.f32 %v209, 0.00390625
        %v213 = vlaneseq
        %v214 = vshrl.u32 %v213, 7
        %vm215 = vcmask 1047556
        %v216 = vrot.slane %v212, 4
        %v217 = vsel %vm215, %v216, %v212
        %v218 = vrot.slane %v217, 4
        %v219 = vsel %vm215, %v218, %v212
        %v220 = vadd.s32 %v214, 4294967295
        %vm221 = vcmp.ge.s32.totalorder %v220, 0
        %vm222 = vcmp.lt.s32.totalorder %v220, 4
        %vm223 = vmand %vm221, %vm222
        %s224 = sld [smem:[#allocation3]]
        %v226 = vrot.slane %v219, 3
        %v228 = vsel %vm223, %v226, 0.0
        %v229 = vstv %s224
        %v230 = vmul.f32 %v229, %v228
        %v231 = vadd.f32 %v230, 0.0
        %vm232 = vcmp.ge.s32.totalorder %v214, 0
        %vm233 = vcmp.lt.s32.totalorder %v214, 4
        %vm234 = vmand %vm232, %vm233
        %s235 = sld [smem:[#allocation3 + $0x1]]
        %v236 = vsel %vm234, %v212, 0.0
        %v237 = vstv %s235
        %v238 = vmul.f32 %v237, %v236
        %v239 = vadd.f32 %v231, %v238
        %v240 = vadd.s32 %v214, 1
        %vm241 = vcmp.ge.s32.totalorder %v240, 0
        %vm242 = vcmp.lt.s32.totalorder %v240, 4
        %vm243 = vmand %vm241, %vm242
        %s244 = sld [smem:[#allocation3 + $0x2]]
        %v245 = vrot.slane %v219, 1
        %v247 = vsel %vm243, %v245, 0.0
        %v248 = vstv %s244
        %v249 = vmul.f32 %v248, %v247
        %v250 = vadd.f32 %v239, %v249
        %v251 = vxor.u32 %v250, 2147483648
        %v252 = vmul.f32 %v251, 1.442695
        %v253 = vpow.pop %v252
        %v254 = vadd.f32 %v253, 1.0
        %v255 = vrcp.pop %v254
        %v256 = vmul.f32 1.0, %v255
        %258 = vset.pattern.permute.xlu0 0
        %259 = vperm.xlu0 %258, %v256
        %v260 = vpop.permute.xlu0 %259
        %v262 = vunpack.c.l.s4 839922192
        %v263 = vunpack.c.0.s8 %v262
        %v264 = vlaneseq
        %v265 = vshrl.u32 %v264, 7
        %v266 = vsub.s32 %v263, %v265
        %v267 = vrot.slane %v260, %v266
        %v269 = vmul.f32 %v138, %v267
        %270 = vst [vmem:[%s137] sm:$0xff] %v269
        %s271 = sand.u32 %s57, 1
        %s272 = scalar_lea.sflag [#allocation6], %s271
        %s273 = sand.u32 %s57, 1
        %s274 = smul.addr %s273, 8
        %s275 = scalar_lea.vmem [#allocation7], %s274
        // Predicated region
        $region29: #{tpu_custom_call.1} parent=23 // pred_check
          %p276 = pneg %p67
        $region30: #{tpu_custom_call.1} parent=23 // pred_check_branch
          %278 = sbr.rel (%p276) target = $region32
        $region31: #{tpu_custom_call.1} parent=23 // pred_region
          %s280 = ssub.s32 128, 128
          %281 = vsyncadd %s272, %s280
          %s282 = smul.addr %s23, 2
          %s283 = smul.addr %s282, 64
          %s284 = scalar_lea.hbm %s2, %s283
          %s286 = sshll.u32 %s275, 4
          %s287 = int_to_ptr.vmem [resolvable:$true] %s286
          %289 = dma.vmem_to_hbm [thread:$0]  %s287, 128, %s284, %s272
        $region32: #{tpu_custom_call.1} parent=23 // pred_fallthru
          _
      $region24: #{tpu_custom_call.1} parent=5 // pred_fallthru
        _
      %p290 = scmp.le.s32.totalorder 2, %s18
      // Predicated region
      $region33: #{tpu_custom_call.1} parent=5 // pred_check
        %p291 = pneg %p290
      $region34: #{tpu_custom_call.1} parent=5 // pred_check_branch
        %293 = sbr.rel (%p291) target = $region36
      $region35: #{tpu_custom_call.1} parent=5 // pred_region
        %s294 = ssub.s32 %s18, 2
        // Predicated region
        $region37: #{tpu_custom_call.1} parent=35 // pred_check
          %p295 = pneg %p73
        $region38: #{tpu_custom_call.1} parent=35 // pred_check_branch
          %297 = sbr.rel (%p295) target = $region40
        $region39: #{tpu_custom_call.1} parent=35 // pred_region
          %s298 = sand.u32 %s58, 1
          %s299 = scalar_lea.sflag [#allocation6], %s298
          %s300 = sand.u32 %s58, 1
          %s301 = smul.addr %s300, 8
          %s302 = scalar_lea.vmem [#allocation7], %s301
          %303 = dma.done %s299, 128
        $region40: #{tpu_custom_call.1} parent=35 // pred_fallthru
          _
      $region36: #{tpu_custom_call.1} parent=5 // pred_fallthru
        _
    $region6: #{tpu_custom_call.1} parent=1 // loop_footer
      %s22 = sadd.s32 1, %s18
    $region7: #{tpu_custom_call.1} parent=1 // loop_footer_branch
      %17 = sbr.rel target = $region3
    $region8: #{tpu_custom_call.1} parent=1 // loop_exit
      _
    %304 = vsyncpa [#allocation5], 1
    %s305 = scalar_lea.sflag [#allocation5], 1
    %306 = vsyncpa %s305, 1
    %307 = vsyncpa [#allocation6], 1
    %s308 = scalar_lea.sflag [#allocation6], 1
    %309 = vsyncpa %s308, 1

</llo_original>
